<compile_context>
chip_gen: v7x
topology: tpu7x:2x2x1
jax: 0.10.0
libtpu: 0.0.40
codegen_flags: <defaults>
</compile_context>

<pallas_src>
import functools

import jax
import jax.numpy as jnp
from jax import lax
from jax.experimental import pallas as pl
from jax.experimental.pallas import tpu as pltpu


# ------------------------------- fused kernel --------------------------------
def _upblock_kernel(x_ref, sc_ref, wu_ref, bu_ref, wpre_ref, bpre_ref,
                    wps_ref, wpp_ref, bpost_ref, o_ref, *,
                    K, stride, T_z, L_up, L_pre, L_out, crop_start):
    """One batch element per grid step. All refs are VMEM-resident.

    x_ref  : (1, Cin, Lx)   bf16      sc_ref : (1, Csh, Lsh)  bf16
    wu_ref : (Cmid, K*Cin)  bf16      bu_ref : (Cmid, 1)      f32
    wpre   : (Cpre, K*Cmid) bf16      bpre   : (Cpre, 1)      f32
    wps    : (Cout, K*Csh)  bf16      wpp    : (Cout, K*Cpre) bf16
    bpost  : (Cout, 1)      f32       o_ref  : (1, Cout, L_out) f32
    """
    x = x_ref[0]                      # (Cin, Lx)
    sc = sc_ref[0]                    # (Csh, Lsh)
    cdt = x.dtype                     # compute dtype (bf16)
    Lx = x.shape[1]

    # ---- up_conv: ConvTranspose1d(Cin->Cmid, K, stride), padding=0 ----------
    # Zero-insert + pad (K-1 both sides) entirely in VMEM via a 0/1 selection
    # matmul:  xz[c, t] = x[c, i]  iff  t == (K-1) + stride*i   (else 0).
    t_idx = lax.broadcasted_iota(jnp.int32, (Lx, T_z), 1)
    i_idx = lax.broadcasted_iota(jnp.int32, (Lx, T_z), 0)
    sel = jnp.where(t_idx == (K - 1) + stride * i_idx,
                    jnp.float32(1), jnp.float32(0)).astype(cdt)      # (Lx, T_z)
    xz = jnp.dot(x, sel, preferred_element_type=jnp.float32).astype(cdt)  # (Cin, T_z)

    # Tap-fused valid conv: single (Cmid, K*Cin) x (K*Cin, L_up) MXU matmul.
    slab_u = jnp.concatenate([xz[:, j:j + L_up] for j in range(K)], axis=0)
    up = jnp.dot(wu_ref[...], slab_u, preferred_element_type=jnp.float32)
    up = (up + bu_ref[...]).astype(cdt)                              # (Cmid, L_up)

    # ---- pre_conv: Conv1d(Cmid->Cpre, K, stride=1), valid -------------------
    slab_p = jnp.concatenate([up[:, j:j + L_pre] for j in range(K)], axis=0)
    pre = jnp.dot(wpre_ref[...], slab_p, preferred_element_type=jnp.float32)
    pre = (pre + bpre_ref[...]).astype(cdt)                          # (Cpre, L_pre)

    # ---- crop + post_conv (channel concat folded into split weights) --------
    sc_c = sc[:, crop_start:crop_start + L_pre]                      # (Csh, L_pre)
    slab_s = jnp.concatenate([sc_c[:, j:j + L_out] for j in range(K)], axis=0)
    slab_q = jnp.concatenate([pre[:, j:j + L_out] for j in range(K)], axis=0)
    acc = jnp.dot(wps_ref[...], slab_s, preferred_element_type=jnp.float32)
    acc = acc + jnp.dot(wpp_ref[...], slab_q, preferred_element_type=jnp.float32)
    o_ref[0] = (acc + bpost_ref[...]).astype(o_ref.dtype)            # (Cout, L_out)


# ------------------------------ UpBlock forward ------------------------------
@functools.partial(jax.jit, static_argnames=("stride",))
def upblock_forward(params, shortcut, x, stride):
    N, Cin, Lx = x.shape
    _, Csh, Lsh = shortcut.shape
    Cmid = params["up_w"].shape[1]             # ConvTranspose1d weight: (Cin, Cmid, K)
    Cpre, _, K = params["pre_w"].shape         # Conv1d weight: (Cout, Cin, K)
    Cout = params["post_w"].shape[0]

    L_up = (Lx - 1) * stride + K               # up_conv output length
    L_pre = L_up - K + 1                       # pre_conv output length
    L_out = L_pre - K + 1                      # post_conv output length
    T_z = L_pre + 2 * (K - 1)                  # zero-inserted + padded length
    crop_start = (Lsh - L_pre) // 2            # center crop of the shortcut

    if L_pre < 1 or L_out < 1:
        raise ValueError("input too short for this kernel size / stride")
    if Lsh < L_pre:
        raise ValueError("shortcut is shorter than the upsampled signal; cannot crop")

    cdt = jnp.bfloat16

    # ConvTranspose1d == valid Conv1d over the zero-inserted/padded input with
    # flipped + transposed weights; flatten all conv weights tap-major for the
    # tap-fused im2col matmuls:  W_flat[o, j*Cin + c] = W[o, c, j].
    wu_eq = jnp.flip(jnp.transpose(params["up_w"], (1, 0, 2)), axis=2)          # (Cmid,Cin,K)
    wu = jnp.transpose(wu_eq, (0, 2, 1)).reshape(Cmid, K * Cin).astype(cdt)
    wpre = jnp.transpose(params["pre_w"], (0, 2, 1)).reshape(Cpre, K * Cmid).astype(cdt)
    wps = jnp.transpose(params["post_w"][:, :Csh, :], (0, 2, 1)
                        ).reshape(Cout, K * Csh).astype(cdt)                    # shortcut slab
    wpp = jnp.transpose(params["post_w"][:, Csh:, :], (0, 2, 1)
                        ).reshape(Cout, K * Cpre).astype(cdt)                   # "up" slab
    bu = params["up_b"].astype(jnp.float32).reshape(Cmid, 1)
    bpre = params["pre_b"].astype(jnp.float32).reshape(Cpre, 1)
    bpost = params["post_b"].astype(jnp.float32).reshape(Cout, 1)

    kernel = functools.partial(
        _upblock_kernel, K=K, stride=stride, T_z=T_z,
        L_up=L_up, L_pre=L_pre, L_out=L_out, crop_start=crop_start)

    def full2d(shape):
        return pl.BlockSpec(shape, lambda n: (0, 0))

    return pl.pallas_call(
        kernel,
        out_shape=jax.ShapeDtypeStruct((N, Cout, L_out), jnp.float32),
        grid=(N,),
        in_specs=[
            pl.BlockSpec((1, Cin, Lx), lambda n: (n, 0, 0)),
            pl.BlockSpec((1, Csh, Lsh), lambda n: (n, 0, 0)),
            full2d((Cmid, K * Cin)), full2d((Cmid, 1)),
            full2d((Cpre, K * Cmid)), full2d((Cpre, 1)),
            full2d((Cout, K * Csh)), full2d((Cout, K * Cpre)), full2d((Cout, 1)),
        ],
        out_specs=pl.BlockSpec((1, Cout, L_out), lambda n: (n, 0, 0)),
        compiler_params=pltpu.CompilerParams(
            dimension_semantics=("parallel",)),   # batch axis -> both TCs on v7x
    )(x.astype(cdt), shortcut.astype(cdt), wu, bu, wpre, bpre, wps, wpp, bpost)


# ----------------------------- pure-JAX reference ----------------------------
def _ref_conv1d(x, w, b):
    y = lax.conv_general_dilated(x, w, (1,), "VALID",
                                 dimension_numbers=("NCH", "OIH", "NCH"),
                                 precision=lax.Precision.HIGHEST)
    return y + b[None, :, None]


def _ref_conv_transpose1d(x, w, b, stride):
    K = w.shape[-1]
    w_eq = jnp.flip(jnp.transpose(w, (1, 0, 2)), axis=2)
    y = lax.conv_general_dilated(x, w_eq, (1,), [(K - 1, K - 1)],
                                 lhs_dilation=(stride,),
                                 dimension_numbers=("NCH", "OIH", "NCH"),
                                 precision=lax.Precision.HIGHEST)
    return y + b[None, :, None]


def upblock_reference(params, shortcut, x, stride):
    """f32 reference that mirrors the kernel's explicit bf16 casts (the MXU
    accumulates bf16 products exactly in f32, so only the casts need mirroring
    for a tight comparison)."""
    rnd = lambda a: a.astype(jnp.bfloat16).astype(jnp.float32)
    up = _ref_conv_transpose1d(rnd(x), rnd(params["up_w"]), params["up_b"], stride)
    up = rnd(up)
    up = _ref_conv1d(up, rnd(params["pre_w"]), params["pre_b"])
    up = rnd(up)
    Lt = up.shape[-1]
    start = (shortcut.shape[-1] - Lt) // 2
    cropped = rnd(shortcut)[:, :, start:start + Lt]
    combined = jnp.concatenate([cropped, up], axis=1)
    return _ref_conv1d(combined, rnd(params["post_w"]), params["post_b"])


# ------------------------------------ main ------------------------------------
if __name__ == "__main__":
    N, in_chs, short_chs, out_chs, k, stride = 2, 4, 4, 8, 5, 4
    L_x, L_short = 16, 64

    key = jax.random.PRNGKey(0)
    k0, k1, k2, k3, k4, k5, k6, k7 = jax.random.split(key, 8)

    params = {
        # ConvTranspose1d weight layout: (in_channels, out_channels, K)
        "up_w": 0.1 * jax.random.normal(k0, (in_chs, in_chs, k), jnp.float32),
        "up_b": 0.1 * jax.random.normal(k1, (in_chs,), jnp.float32),
        # Conv1d weight layout: (out_channels, in_channels, K)
        "pre_w": 0.1 * jax.random.normal(k2, (out_chs, in_chs, k), jnp.float32),
        "pre_b": 0.1 * jax.random.normal(k3, (out_chs,), jnp.float32),
        "post_w": 0.1 * jax.random.normal(
            k4, (out_chs, out_chs + short_chs, k), jnp.float32),
        "post_b": 0.1 * jax.random.normal(k5, (out_chs,), jnp.float32),
    }

    x = jax.random.normal(k6, (N, in_chs, L_x), jnp.float32)
    shortcut = jax.random.normal(k7, (N, short_chs, L_short), jnp.float32)

    out = jax.block_until_ready(upblock_forward(params, shortcut, x, stride=stride))
    ref = upblock_reference(params, shortcut, x, stride)

    assert out.shape == ref.shape, (out.shape, ref.shape)
    max_err = float(jnp.max(jnp.abs(out - ref)))
    assert jnp.allclose(out, ref, atol=2e-2, rtol=2e-2), \
        f"mismatch vs reference (max abs err {max_err})"
    print("KERNEL_OK")
</pallas_src>

<mosaic_0001>
module attributes {stable_mosaic.version = 11 : i64} {
  func.func @_upblock_kernel(%arg0: i32, %arg1: memref<1x4x16xbf16, #tpu.memory_space<vmem>>, %arg2: memref<1x4x64xbf16, #tpu.memory_space<vmem>>, %arg3: memref<4x20xbf16, #tpu.memory_space<vmem>>, %arg4: memref<4x1xf32, #tpu.memory_space<vmem>>, %arg5: memref<8x20xbf16, #tpu.memory_space<vmem>>, %arg6: memref<8x1xf32, #tpu.memory_space<vmem>>, %arg7: memref<8x20xbf16, #tpu.memory_space<vmem>>, %arg8: memref<8x40xbf16, #tpu.memory_space<vmem>>, %arg9: memref<8x1xf32, #tpu.memory_space<vmem>>, %arg10: memref<1x8x57xf32, #tpu.memory_space<vmem>>) attributes {dimension_semantics = [#tpu.dimension_semantics<parallel>], iteration_bounds = array<i64: 2>, scalar_prefetch = 0 : i64, scratch_operands = 0 : i64, tpu.core_type = #tpu.core_type<tc>, window_params = [{transform_indices = @transform_0, window_bounds = array<i64: 1, 4, 16>}, {transform_indices = @transform_1, window_bounds = array<i64: 1, 4, 64>}, {pipeline_mode = #tpu.pipeline_mode<synchronous>, transform_indices = @transform_2, window_bounds = array<i64: 4, 20>}, {pipeline_mode = #tpu.pipeline_mode<synchronous>, transform_indices = @transform_3, window_bounds = array<i64: 4, 1>}, {pipeline_mode = #tpu.pipeline_mode<synchronous>, transform_indices = @transform_4, window_bounds = array<i64: 8, 20>}, {pipeline_mode = #tpu.pipeline_mode<synchronous>, transform_indices = @transform_5, window_bounds = array<i64: 8, 1>}, {pipeline_mode = #tpu.pipeline_mode<synchronous>, transform_indices = @transform_6, window_bounds = array<i64: 8, 20>}, {pipeline_mode = #tpu.pipeline_mode<synchronous>, transform_indices = @transform_7, window_bounds = array<i64: 8, 40>}, {pipeline_mode = #tpu.pipeline_mode<synchronous>, transform_indices = @transform_8, window_bounds = array<i64: 8, 1>}, {transform_indices = @transform_9, window_bounds = array<i64: 1, 8, 57>}]} {
    %c0 = arith.constant 0 : index
    %c0_0 = arith.constant 0 : index
    %c0_1 = arith.constant 0 : index
    %0 = vector.load %arg1[%c0, %c0_0, %c0_1] : memref<1x4x16xbf16, #tpu.memory_space<vmem>>, vector<1x4x16xbf16>
    %1 = vector.shape_cast %0 : vector<1x4x16xbf16> to vector<4x16xbf16>
    %c0_2 = arith.constant 0 : index
    %c0_3 = arith.constant 0 : index
    %c0_4 = arith.constant 0 : index
    %2 = vector.load %arg2[%c0_2, %c0_3, %c0_4] : memref<1x4x64xbf16, #tpu.memory_space<vmem>>, vector<1x4x64xbf16>
    %3 = vector.shape_cast %2 : vector<1x4x64xbf16> to vector<4x64xbf16>
    %4 = tpu.iota {dimensions = array<i32: 1>} : vector<16x69xi32>
    %5 = tpu.iota {dimensions = array<i32: 0>} : vector<16x69xi32>
    %c4_i32 = arith.constant 4 : i32
    %6 = vector.broadcast %c4_i32 : i32 to vector<16x69xi32>
    %7 = arith.muli %6, %5 : vector<16x69xi32>
    %c4_i32_5 = arith.constant 4 : i32
    %8 = vector.broadcast %c4_i32_5 : i32 to vector<16x69xi32>
    %9 = arith.addi %8, %7 : vector<16x69xi32>
    %10 = arith.cmpi eq, %4, %9 : vector<16x69xi32>
    %cst = arith.constant 1.000000e+00 : f32
    %cst_6 = arith.constant 0.000000e+00 : f32
    %11 = vector.broadcast %cst : f32 to vector<16x69xf32>
    %12 = vector.broadcast %cst_6 : f32 to vector<16x69xf32>
    %13 = arith.select %10, %11, %12 : vector<16x69xi1>, vector<16x69xf32>
    %14 = arith.truncf %13 : vector<16x69xf32> to vector<16x69xbf16>
    %cst_7 = arith.constant dense<0.000000e+00> : vector<4x69xf32>
    %15 = tpu.matmul %1, %14, %cst_7 {dimension_numbers = #tpu.dot_dimension_numbers<[1], [0], [0], [1], [0, 0, 1, 1], [], []>} : vector<4x16xbf16>, vector<16x69xbf16>, vector<4x69xf32> -> vector<4x69xf32>
    %16 = arith.truncf %15 : vector<4x69xf32> to vector<4x69xbf16>
    %17 = vector.extract_strided_slice %16 {offsets = [0, 0], sizes = [4, 65], strides = [1, 1]} : vector<4x69xbf16> to vector<4x65xbf16>
    %18 = vector.extract_strided_slice %16 {offsets = [0, 1], sizes = [4, 65], strides = [1, 1]} : vector<4x69xbf16> to vector<4x65xbf16>
    %19 = vector.extract_strided_slice %16 {offsets = [0, 2], sizes = [4, 65], strides = [1, 1]} : vector<4x69xbf16> to vector<4x65xbf16>
    %20 = vector.extract_strided_slice %16 {offsets = [0, 3], sizes = [4, 65], strides = [1, 1]} : vector<4x69xbf16> to vector<4x65xbf16>
    %21 = vector.extract_strided_slice %16 {offsets = [0, 4], sizes = [4, 65], strides = [1, 1]} : vector<4x69xbf16> to vector<4x65xbf16>
    %22 = tpu.concatenate %17, %18, %19, %20, %21 in 0 : vector<4x65xbf16>, vector<4x65xbf16>, vector<4x65xbf16>, vector<4x65xbf16>, vector<4x65xbf16> -> vector<20x65xbf16>
    %c0_8 = arith.constant 0 : index
    %c0_9 = arith.constant 0 : index
    %23 = vector.load %arg3[%c0_8, %c0_9] : memref<4x20xbf16, #tpu.memory_space<vmem>>, vector<4x20xbf16>
    %cst_10 = arith.constant dense<0.000000e+00> : vector<4x65xf32>
    %24 = tpu.matmul %23, %22, %cst_10 {dimension_numbers = #tpu.dot_dimension_numbers<[1], [0], [0], [1], [0, 0, 1, 1], [], []>} : vector<4x20xbf16>, vector<20x65xbf16>, vector<4x65xf32> -> vector<4x65xf32>
    %c0_11 = arith.constant 0 : index
    %c0_12 = arith.constant 0 : index
    %25 = vector.load %arg4[%c0_11, %c0_12] : memref<4x1xf32, #tpu.memory_space<vmem>>, vector<4x1xf32>
    %26 = vector.broadcast %25 : vector<4x1xf32> to vector<4x65xf32>
    %27 = arith.addf %24, %26 : vector<4x65xf32>
    %28 = arith.truncf %27 : vector<4x65xf32> to vector<4x65xbf16>
    %29 = vector.extract_strided_slice %28 {offsets = [0, 0], sizes = [4, 61], strides = [1, 1]} : vector<4x65xbf16> to vector<4x61xbf16>
    %30 = vector.extract_strided_slice %28 {offsets = [0, 1], sizes = [4, 61], strides = [1, 1]} : vector<4x65xbf16> to vector<4x61xbf16>
    %31 = vector.extract_strided_slice %28 {offsets = [0, 2], sizes = [4, 61], strides = [1, 1]} : vector<4x65xbf16> to vector<4x61xbf16>
    %32 = vector.extract_strided_slice %28 {offsets = [0, 3], sizes = [4, 61], strides = [1, 1]} : vector<4x65xbf16> to vector<4x61xbf16>
    %33 = vector.extract_strided_slice %28 {offsets = [0, 4], sizes = [4, 61], strides = [1, 1]} : vector<4x65xbf16> to vector<4x61xbf16>
    %34 = tpu.concatenate %29, %30, %31, %32, %33 in 0 : vector<4x61xbf16>, vector<4x61xbf16>, vector<4x61xbf16>, vector<4x61xbf16>, vector<4x61xbf16> -> vector<20x61xbf16>
    %c0_13 = arith.constant 0 : index
    %c0_14 = arith.constant 0 : index
    %35 = vector.load %arg5[%c0_13, %c0_14] : memref<8x20xbf16, #tpu.memory_space<vmem>>, vector<8x20xbf16>
    %cst_15 = arith.constant dense<0.000000e+00> : vector<8x61xf32>
    %36 = tpu.matmul %35, %34, %cst_15 {dimension_numbers = #tpu.dot_dimension_numbers<[1], [0], [0], [1], [0, 0, 1, 1], [], []>} : vector<8x20xbf16>, vector<20x61xbf16>, vector<8x61xf32> -> vector<8x61xf32>
    %c0_16 = arith.constant 0 : index
    %c0_17 = arith.constant 0 : index
    %37 = vector.load %arg6[%c0_16, %c0_17] : memref<8x1xf32, #tpu.memory_space<vmem>>, vector<8x1xf32>
    %38 = vector.broadcast %37 : vector<8x1xf32> to vector<8x61xf32>
    %39 = arith.addf %36, %38 : vector<8x61xf32>
    %40 = arith.truncf %39 : vector<8x61xf32> to vector<8x61xbf16>
    %41 = vector.extract_strided_slice %3 {offsets = [0, 1], sizes = [4, 61], strides = [1, 1]} : vector<4x64xbf16> to vector<4x61xbf16>
    %42 = vector.extract_strided_slice %41 {offsets = [0, 0], sizes = [4, 57], strides = [1, 1]} : vector<4x61xbf16> to vector<4x57xbf16>
    %43 = vector.extract_strided_slice %41 {offsets = [0, 1], sizes = [4, 57], strides = [1, 1]} : vector<4x61xbf16> to vector<4x57xbf16>
    %44 = vector.extract_strided_slice %41 {offsets = [0, 2], sizes = [4, 57], strides = [1, 1]} : vector<4x61xbf16> to vector<4x57xbf16>
    %45 = vector.extract_strided_slice %41 {offsets = [0, 3], sizes = [4, 57], strides = [1, 1]} : vector<4x61xbf16> to vector<4x57xbf16>
    %46 = vector.extract_strided_slice %41 {offsets = [0, 4], sizes = [4, 57], strides = [1, 1]} : vector<4x61xbf16> to vector<4x57xbf16>
    %47 = tpu.concatenate %42, %43, %44, %45, %46 in 0 : vector<4x57xbf16>, vector<4x57xbf16>, vector<4x57xbf16>, vector<4x57xbf16>, vector<4x57xbf16> -> vector<20x57xbf16>
    %48 = vector.extract_strided_slice %40 {offsets = [0, 0], sizes = [8, 57], strides = [1, 1]} : vector<8x61xbf16> to vector<8x57xbf16>
    %49 = vector.extract_strided_slice %40 {offsets = [0, 1], sizes = [8, 57], strides = [1, 1]} : vector<8x61xbf16> to vector<8x57xbf16>
    %50 = vector.extract_strided_slice %40 {offsets = [0, 2], sizes = [8, 57], strides = [1, 1]} : vector<8x61xbf16> to vector<8x57xbf16>
    %51 = vector.extract_strided_slice %40 {offsets = [0, 3], sizes = [8, 57], strides = [1, 1]} : vector<8x61xbf16> to vector<8x57xbf16>
    %52 = vector.extract_strided_slice %40 {offsets = [0, 4], sizes = [8, 57], strides = [1, 1]} : vector<8x61xbf16> to vector<8x57xbf16>
    %53 = tpu.concatenate %48, %49, %50, %51, %52 in 0 : vector<8x57xbf16>, vector<8x57xbf16>, vector<8x57xbf16>, vector<8x57xbf16>, vector<8x57xbf16> -> vector<40x57xbf16>
    %c0_18 = arith.constant 0 : index
    %c0_19 = arith.constant 0 : index
    %54 = vector.load %arg7[%c0_18, %c0_19] : memref<8x20xbf16, #tpu.memory_space<vmem>>, vector<8x20xbf16>
    %cst_20 = arith.constant dense<0.000000e+00> : vector<8x57xf32>
    %55 = tpu.matmul %54, %47, %cst_20 {dimension_numbers = #tpu.dot_dimension_numbers<[1], [0], [0], [1], [0, 0, 1, 1], [], []>} : vector<8x20xbf16>, vector<20x57xbf16>, vector<8x57xf32> -> vector<8x57xf32>
    %c0_21 = arith.constant 0 : index
    %c0_22 = arith.constant 0 : index
    %56 = vector.load %arg8[%c0_21, %c0_22] : memref<8x40xbf16, #tpu.memory_space<vmem>>, vector<8x40xbf16>
    %cst_23 = arith.constant dense<0.000000e+00> : vector<8x57xf32>
    %57 = tpu.matmul %56, %53, %cst_23 {dimension_numbers = #tpu.dot_dimension_numbers<[1], [0], [0], [1], [0, 0, 1, 1], [], []>} : vector<8x40xbf16>, vector<40x57xbf16>, vector<8x57xf32> -> vector<8x57xf32>
    %58 = arith.addf %55, %57 : vector<8x57xf32>
    %c0_24 = arith.constant 0 : index
    %c0_25 = arith.constant 0 : index
    %59 = vector.load %arg9[%c0_24, %c0_25] : memref<8x1xf32, #tpu.memory_space<vmem>>, vector<8x1xf32>
    %60 = vector.broadcast %59 : vector<8x1xf32> to vector<8x57xf32>
    %61 = arith.addf %58, %60 : vector<8x57xf32>
    %c0_26 = arith.constant 0 : index
    %c0_27 = arith.constant 0 : index
    %c0_28 = arith.constant 0 : index
    %62 = vector.load %arg10[%c0_26, %c0_27, %c0_28] : memref<1x8x57xf32, #tpu.memory_space<vmem>>, vector<1x8x57xf32>
    %63 = vector.shape_cast %62 : vector<1x8x57xf32> to vector<8x57xf32>
    %64 = vector.shape_cast %61 : vector<8x57xf32> to vector<1x8x57xf32>
    tpu.vector_store %arg10[%c0_26, %c0_27, %c0_28], %64 {strides = array<i32>} : memref<1x8x57xf32, #tpu.memory_space<vmem>>, vector<1x8x57xf32>,
    return
  }
  func.func @transform_0(%arg0: i32) -> (i32, i32, i32) {
    %c0_i32 = arith.constant 0 : i32
    %c0_i32_0 = arith.constant 0 : i32
    %c0_i32_1 = arith.constant 0 : i32
    return %arg0, %c0_i32, %c0_i32_0 : i32, i32, i32
  }
  func.func @transform_1(%arg0: i32) -> (i32, i32, i32) {
    %c0_i32 = arith.constant 0 : i32
    %c0_i32_0 = arith.constant 0 : i32
    %c0_i32_1 = arith.constant 0 : i32
    return %arg0, %c0_i32, %c0_i32_0 : i32, i32, i32
  }
  func.func @transform_2(%arg0: i32) -> (i32, i32) {
    %c0_i32 = arith.constant 0 : i32
    %c0_i32_0 = arith.constant 0 : i32
    %c0_i32_1 = arith.constant 0 : i32
    return %c0_i32, %c0_i32_0 : i32, i32
  }
  func.func @transform_3(%arg0: i32) -> (i32, i32) {
    %c0_i32 = arith.constant 0 : i32
    %c0_i32_0 = arith.constant 0 : i32
    %c0_i32_1 = arith.constant 0 : i32
    return %c0_i32, %c0_i32_0 : i32, i32
  }
  func.func @transform_4(%arg0: i32) -> (i32, i32) {
    %c0_i32 = arith.constant 0 : i32
    %c0_i32_0 = arith.constant 0 : i32
    %c0_i32_1 = arith.constant 0 : i32
    return %c0_i32, %c0_i32_0 : i32, i32
  }
  func.func @transform_5(%arg0: i32) -> (i32, i32) {
    %c0_i32 = arith.constant 0 : i32
    %c0_i32_0 = arith.constant 0 : i32
    %c0_i32_1 = arith.constant 0 : i32
    return %c0_i32, %c0_i32_0 : i32, i32
  }
  func.func @transform_6(%arg0: i32) -> (i32, i32) {
    %c0_i32 = arith.constant 0 : i32
    %c0_i32_0 = arith.constant 0 : i32
    %c0_i32_1 = arith.constant 0 : i32
    return %c0_i32, %c0_i32_0 : i32, i32
  }
  func.func @transform_7(%arg0: i32) -> (i32, i32) {
    %c0_i32 = arith.constant 0 : i32
    %c0_i32_0 = arith.constant 0 : i32
    %c0_i32_1 = arith.constant 0 : i32
    return %c0_i32, %c0_i32_0 : i32, i32
  }
  func.func @transform_8(%arg0: i32) -> (i32, i32) {
    %c0_i32 = arith.constant 0 : i32
    %c0_i32_0 = arith.constant 0 : i32
    %c0_i32_1 = arith.constant 0 : i32
    return %c0_i32, %c0_i32_0 : i32, i32
  }
  func.func @transform_9(%arg0: i32) -> (i32, i32, i32) {
    %c0_i32 = arith.constant 0 : i32
    %c0_i32_0 = arith.constant 0 : i32
    %c0_i32_1 = arith.constant 0 : i32
    return %arg0, %c0_i32, %c0_i32_0 : i32, i32, i32
  }
}

</mosaic_0001>

<llo_original>
// kernel: upblock_forward.1
$region0: #{upblock_forward.1}
  #allocation0 [shape = 'u32[]', space=smem, size = 0x4, offset = 0x4, fixed_abs, tag = 'smem constant byte address 0x4 - core index']
  #allocation1 [shape = 'u32[144,128]{1,0:T(1,128)}', space=vmem, size = 0x12000, scoped, tag = 'internal scratch']
  %s0 = inlined_call_operand.vmem [shape: bf16[2,4,16], index: 0, kind: input, shape index: {}]
  %s1 = inlined_call_operand.vmem [shape: bf16[2,4,64], index: 1, kind: input, shape index: {}]
  %s2 = inlined_call_operand.vmem [shape: bf16[4,20], index: 2, kind: input, shape index: {}]
  %s3 = inlined_call_operand.vmem [shape: f32[4,1], index: 3, kind: input, shape index: {}]
  %s4 = inlined_call_operand.vmem [shape: bf16[8,20], index: 4, kind: input, shape index: {}]
  %s5 = inlined_call_operand.vmem [shape: f32[8,1], index: 5, kind: input, shape index: {}]
  %s6 = inlined_call_operand.vmem [shape: bf16[8,20], index: 6, kind: input, shape index: {}]
  %s7 = inlined_call_operand.vmem [shape: bf16[8,40], index: 7, kind: input, shape index: {}]
  %s8 = inlined_call_operand.vmem [shape: f32[8,1], index: 8, kind: input, shape index: {}]
  %s9 = inlined_call_operand.hbm [shape: f32[2,8,57], index: 9, kind: output, shape index: {}]
  %s10 = sld [smem:[#allocation0]]
  $region69: #{upblock_forward.1} parent=0
    _
  %s12 = ssub.s32 1, %s10
  %s13 = scalar_select 0, %s12, %s10
  $region1: #{upblock_forward.1} parent=0
    #allocation2 [shape = 'u8[8192]{0}', space=vmem, size = 0x2000, scoped, tag = 'output window, operand 0']
    #allocation3 [shape = 's32[2]{0}', space=sflag, size = 0x8, scoped, tag = 'scoped memory for upblock_forward.1']
    %14 = vsyncpa [#allocation3], 0
    %s15 = scalar_lea.sflag [#allocation3], 1
    %16 = vsyncpa %s15, 0
    loop: start=0, step=1, limit=4
    $region2: #{upblock_forward.1} parent=1 // loop_pre_header
      _
    $region3: #{upblock_forward.1} parent=1 // loop_header
      %s18 = sphi 0, %s22
      %p19 = scmp.ge.s32.totalorder %s18, 4
      %s28 = sphi 0, %s30
      %s31 = sphi 0, %s28
      %s32 = sphi 0, %s31
      %s48 = sphi 0, %s32
      %s54 = sphi 0, %s56
      %s57 = sphi 0, %s54
      %s58 = sphi 0, %s57
      %s74 = sphi 0, %s58
      %s78 = sphi 0, %s78
      %s80 = sphi 0, %s78
      %s81 = sphi 0, %s80
      %s95 = sphi 0, %s81
      %s99 = sphi 0, %s99
      %s101 = sphi 0, %s99
      %s102 = sphi 0, %s101
      %s116 = sphi 0, %s102
      %s120 = sphi 0, %s120
      %s122 = sphi 0, %s120
      %s123 = sphi 0, %s122
      %s137 = sphi 0, %s123
      %s141 = sphi 0, %s141
      %s143 = sphi 0, %s141
      %s144 = sphi 0, %s143
      %s158 = sphi 0, %s144
      %s162 = sphi 0, %s162
      %s164 = sphi 0, %s162
      %s165 = sphi 0, %s164
      %s179 = sphi 0, %s165
      %s183 = sphi 0, %s183
      %s185 = sphi 0, %s183
      %s186 = sphi 0, %s185
      %s200 = sphi 0, %s186
      %s204 = sphi 0, %s204
      %s206 = sphi 0, %s204
      %s207 = sphi 0, %s206
      %s221 = sphi 0, %s207
      %s227 = sphi 0, %s229
      %s230 = sphi 0, %s227
      %s231 = sphi 0, %s230
      %s247 = sphi 0, %s231
    $region4: #{upblock_forward.1} parent=1 // loop_header_branch
      %21 = sbr.rel (%p19) target = $region8
    $region5: #{upblock_forward.1} parent=1 // loop_body
      %s23 = ssub.s32 %s18, 1
      %s24 = ssub.s32 %s18, 2
      %s25 = sadd.s32 %s18, 1
      %s26 = ssub.s32 %s18, %s25
      %p27 = scmp.eq.s32.totalorder %s26, 0
      %s29 = sadd.s32 %s28, 1
      %s30 = scalar_select %p27, %s28, %s29
      %p33 = pneg %p27
      %p34 = scmp.eq.s32.totalorder %s18, 1
      %p35 = por %p33, %p34
      %p36 = scmp.ne.s32.totalorder %s28, %s31
      %p37 = scmp.eq.s32.totalorder %s18, 0
      %p38 = por %p36, %p37
      %p39 = scmp.ne.s32.totalorder %s28, %s31
      %p40 = scmp.eq.s32.totalorder %s23, 1
      %p41 = por %p39, %p40
      %p42 = scmp.ne.s32.totalorder %s31, %s32
      %p43 = scmp.eq.s32.totalorder %s23, 0
      %p44 = por %p42, %p43
      %p45 = scmp.ne.s32.totalorder %s31, %s32
      %p46 = scmp.eq.s32.totalorder %s24, 1
      %p47 = por %p45, %p46
      %p49 = scmp.ne.s32.totalorder %s32, %s48
      %p50 = scmp.eq.s32.totalorder %s24, 0
      %p51 = por %p49, %p50
      %s52 = ssub.s32 %s18, %s25
      %p53 = scmp.eq.s32.totalorder %s52, 0
      %s55 = sadd.s32 %s54, 1
      %s56 = scalar_select %p53, %s54, %s55
      %p59 = pneg %p53
      %p60 = scmp.eq.s32.totalorder %s18, 1
      %p61 = por %p59, %p60
      %p62 = scmp.ne.s32.totalorder %s54, %s57
      %p63 = scmp.eq.s32.totalorder %s18, 0
      %p64 = por %p62, %p63
      %p65 = scmp.ne.s32.totalorder %s54, %s57
      %p66 = scmp.eq.s32.totalorder %s23, 1
      %p67 = por %p65, %p66
      %p68 = scmp.ne.s32.totalorder %s57, %s58
      %p69 = scmp.eq.s32.totalorder %s23, 0
      %p70 = por %p68, %p69
      %p71 = scmp.ne.s32.totalorder %s57, %s58
      %p72 = scmp.eq.s32.totalorder %s24, 1
      %p73 = por %p71, %p72
      %p75 = scmp.ne.s32.totalorder %s58, %s74
      %p76 = scmp.eq.s32.totalorder %s24, 0
      %p77 = por %p75, %p76
      %s79 = sadd.s32 %s78, 1
      %p82 = scmp.eq.s32.totalorder %s18, 1
      %p83 = scmp.ne.s32.totalorder %s78, %s80
      %p84 = scmp.eq.s32.totalorder %s18, 0
      %p85 = por %p83, %p84
      %p86 = scmp.ne.s32.totalorder %s78, %s80
      %p87 = scmp.eq.s32.totalorder %s23, 1
      %p88 = por %p86, %p87
      %p89 = scmp.ne.s32.totalorder %s80, %s81
      %p90 = scmp.eq.s32.totalorder %s23, 0
      %p91 = por %p89, %p90
      %p92 = scmp.ne.s32.totalorder %s80, %s81
      %p93 = scmp.eq.s32.totalorder %s24, 1
      %p94 = por %p92, %p93
      %p96 = scmp.ne.s32.totalorder %s81, %s95
      %p97 = scmp.eq.s32.totalorder %s24, 0
      %p98 = por %p96, %p97
      %s100 = sadd.s32 %s99, 1
      %p103 = scmp.eq.s32.totalorder %s18, 1
      %p104 = scmp.ne.s32.totalorder %s99, %s101
      %p105 = scmp.eq.s32.totalorder %s18, 0
      %p106 = por %p104, %p105
      %p107 = scmp.ne.s32.totalorder %s99, %s101
      %p108 = scmp.eq.s32.totalorder %s23, 1
      %p109 = por %p107, %p108
      %p110 = scmp.ne.s32.totalorder %s101, %s102
      %p111 = scmp.eq.s32.totalorder %s23, 0
      %p112 = por %p110, %p111
      %p113 = scmp.ne.s32.totalorder %s101, %s102
      %p114 = scmp.eq.s32.totalorder %s24, 1
      %p115 = por %p113, %p114
      %p117 = scmp.ne.s32.totalorder %s102, %s116
      %p118 = scmp.eq.s32.totalorder %s24, 0
      %p119 = por %p117, %p118
      %s121 = sadd.s32 %s120, 1
      %p124 = scmp.eq.s32.totalorder %s18, 1
      %p125 = scmp.ne.s32.totalorder %s120, %s122
      %p126 = scmp.eq.s32.totalorder %s18, 0
      %p127 = por %p125, %p126
      %p128 = scmp.ne.s32.totalorder %s120, %s122
      %p129 = scmp.eq.s32.totalorder %s23, 1
      %p130 = por %p128, %p129
      %p131 = scmp.ne.s32.totalorder %s122, %s123
      %p132 = scmp.eq.s32.totalorder %s23, 0
      %p133 = por %p131, %p132
      %p134 = scmp.ne.s32.totalorder %s122, %s123
      %p135 = scmp.eq.s32.totalorder %s24, 1
      %p136 = por %p134, %p135
      %p138 = scmp.ne.s32.totalorder %s123, %s137
      %p139 = scmp.eq.s32.totalorder %s24, 0
      %p140 = por %p138, %p139
      %s142 = sadd.s32 %s141, 1
      %p145 = scmp.eq.s32.totalorder %s18, 1
      %p146 = scmp.ne.s32.totalorder %s141, %s143
      %p147 = scmp.eq.s32.totalorder %s18, 0
      %p148 = por %p146, %p147
      %p149 = scmp.ne.s32.totalorder %s141, %s143
      %p150 = scmp.eq.s32.totalorder %s23, 1
      %p151 = por %p149, %p150
      %p152 = scmp.ne.s32.totalorder %s143, %s144
      %p153 = scmp.eq.s32.totalorder %s23, 0
      %p154 = por %p152, %p153
      %p155 = scmp.ne.s32.totalorder %s143, %s144
      %p156 = scmp.eq.s32.totalorder %s24, 1
      %p157 = por %p155, %p156
      %p159 = scmp.ne.s32.totalorder %s144, %s158
      %p160 = scmp.eq.s32.totalorder %s24, 0
      %p161 = por %p159, %p160
      %s163 = sadd.s32 %s162, 1
      %p166 = scmp.eq.s32.totalorder %s18, 1
      %p167 = scmp.ne.s32.totalorder %s162, %s164
      %p168 = scmp.eq.s32.totalorder %s18, 0
      %p169 = por %p167, %p168
      %p170 = scmp.ne.s32.totalorder %s162, %s164
      %p171 = scmp.eq.s32.totalorder %s23, 1
      %p172 = por %p170, %p171
      %p173 = scmp.ne.s32.totalorder %s164, %s165
      %p174 = scmp.eq.s32.totalorder %s23, 0
      %p175 = por %p173, %p174
      %p176 = scmp.ne.s32.totalorder %s164, %s165
      %p177 = scmp.eq.s32.totalorder %s24, 1
      %p178 = por %p176, %p177
      %p180 = scmp.ne.s32.totalorder %s165, %s179
      %p181 = scmp.eq.s32.totalorder %s24, 0
      %p182 = por %p180, %p181
      %s184 = sadd.s32 %s183, 1
      %p187 = scmp.eq.s32.totalorder %s18, 1
      %p188 = scmp.ne.s32.totalorder %s183, %s185
      %p189 = scmp.eq.s32.totalorder %s18, 0
      %p190 = por %p188, %p189
      %p191 = scmp.ne.s32.totalorder %s183, %s185
      %p192 = scmp.eq.s32.totalorder %s23, 1
      %p193 = por %p191, %p192
      %p194 = scmp.ne.s32.totalorder %s185, %s186
      %p195 = scmp.eq.s32.totalorder %s23, 0
      %p196 = por %p194, %p195
      %p197 = scmp.ne.s32.totalorder %s185, %s186
      %p198 = scmp.eq.s32.totalorder %s24, 1
      %p199 = por %p197, %p198
      %p201 = scmp.ne.s32.totalorder %s186, %s200
      %p202 = scmp.eq.s32.totalorder %s24, 0
      %p203 = por %p201, %p202
      %s205 = sadd.s32 %s204, 1
      %p208 = scmp.eq.s32.totalorder %s18, 1
      %p209 = scmp.ne.s32.totalorder %s204, %s206
      %p210 = scmp.eq.s32.totalorder %s18, 0
      %p211 = por %p209, %p210
      %p212 = scmp.ne.s32.totalorder %s204, %s206
      %p213 = scmp.eq.s32.totalorder %s23, 1
      %p214 = por %p212, %p213
      %p215 = scmp.ne.s32.totalorder %s206, %s207
      %p216 = scmp.eq.s32.totalorder %s23, 0
      %p217 = por %p215, %p216
      %p218 = scmp.ne.s32.totalorder %s206, %s207
      %p219 = scmp.eq.s32.totalorder %s24, 1
      %p220 = por %p218, %p219
      %p222 = scmp.ne.s32.totalorder %s207, %s221
      %p223 = scmp.eq.s32.totalorder %s24, 0
      %p224 = por %p222, %p223
      %s225 = ssub.s32 %s18, %s25
      %p226 = scmp.eq.s32.totalorder %s225, 0
      %s228 = sadd.s32 %s227, 1
      %s229 = scalar_select %p226, %s227, %s228
      %p232 = pneg %p226
      %p233 = scmp.eq.s32.totalorder %s18, 1
      %p234 = por %p232, %p233
      %p235 = scmp.ne.s32.totalorder %s227, %s230
      %p236 = scmp.eq.s32.totalorder %s18, 0
      %p237 = por %p235, %p236
      %p238 = scmp.ne.s32.totalorder %s227, %s230
      %p239 = scmp.eq.s32.totalorder %s23, 1
      %p240 = por %p238, %p239
      %p241 = scmp.ne.s32.totalorder %s230, %s231
      %p242 = scmp.eq.s32.totalorder %s23, 0
      %p243 = por %p241, %p242
      %p244 = scmp.ne.s32.totalorder %s230, %s231
      %p245 = scmp.eq.s32.totalorder %s24, 1
      %p246 = por %p244, %p245
      %p248 = scmp.ne.s32.totalorder %s231, %s247
      %p249 = scmp.eq.s32.totalorder %s24, 0
      %p250 = por %p248, %p249
      %p251 = scmp.le.s32.totalorder 1, %s18
      %p252 = scmp.lt.s32.totalorder %s18, 3
      %p253 = pnand %p251, %p252
      %p254 = pneg %p253
      // Predicated region
      $region9: #{upblock_forward.1} parent=5 // pred_check
        _
      $region10: #{upblock_forward.1} parent=5 // pred_check_branch
        %256 = sbr.rel (%p253) target = $region12
      $region11: #{upblock_forward.1} parent=5 // pred_region
        %s257 = ssub.s32 %s18, 1
        // Predicated region
        $region13: #{upblock_forward.1} parent=11 // pred_check
          %p258 = pneg %p91
        $region14: #{upblock_forward.1} parent=11 // pred_check_branch
          %260 = sbr.rel (%p258) target = $region16
        $region15: #{upblock_forward.1} parent=11 // pred_region
          _
        $region16: #{upblock_forward.1} parent=11 // pred_fallthru
          _
        // Predicated region
        $region17: #{upblock_forward.1} parent=11 // pred_check
          %p261 = pneg %p112
        $region18: #{upblock_forward.1} parent=11 // pred_check_branch
          %263 = sbr.rel (%p261) target = $region20
        $region19: #{upblock_forward.1} parent=11 // pred_region
          _
        $region20: #{upblock_forward.1} parent=11 // pred_fallthru
          _
        // Predicated region
        $region21: #{upblock_forward.1} parent=11 // pred_check
          %p264 = pneg %p133
        $region22: #{upblock_forward.1} parent=11 // pred_check_branch
          %266 = sbr.rel (%p264) target = $region24
        $region23: #{upblock_forward.1} parent=11 // pred_region
          _
        $region24: #{upblock_forward.1} parent=11 // pred_fallthru
          _
        // Predicated region
        $region25: #{upblock_forward.1} parent=11 // pred_check
          %p267 = pneg %p154
        $region26: #{upblock_forward.1} parent=11 // pred_check_branch
          %269 = sbr.rel (%p267) target = $region28
        $region27: #{upblock_forward.1} parent=11 // pred_region
          _
        $region28: #{upblock_forward.1} parent=11 // pred_fallthru
          _
        // Predicated region
        $region29: #{upblock_forward.1} parent=11 // pred_check
          %p270 = pneg %p175
        $region30: #{upblock_forward.1} parent=11 // pred_check_branch
          %272 = sbr.rel (%p270) target = $region32
        $region31: #{upblock_forward.1} parent=11 // pred_region
          _
        $region32: #{upblock_forward.1} parent=11 // pred_fallthru
          _
        // Predicated region
        $region33: #{upblock_forward.1} parent=11 // pred_check
          %p273 = pneg %p196
        $region34: #{upblock_forward.1} parent=11 // pred_check_branch
          %275 = sbr.rel (%p273) target = $region36
        $region35: #{upblock_forward.1} parent=11 // pred_region
          _
        $region36: #{upblock_forward.1} parent=11 // pred_fallthru
          _
        // Predicated region
        $region37: #{upblock_forward.1} parent=11 // pred_check
          %p276 = pneg %p217
        $region38: #{upblock_forward.1} parent=11 // pred_check_branch
          %278 = sbr.rel (%p276) target = $region40
        $region39: #{upblock_forward.1} parent=11 // pred_region
          _
        $region40: #{upblock_forward.1} parent=11 // pred_fallthru
          _
      $region12: #{upblock_forward.1} parent=5 // pred_fallthru
        _
      %p279 = scmp.lt.s32.totalorder %s18, 2
      // Predicated region
      $region41: #{upblock_forward.1} parent=5 // pred_check
        %p280 = pneg %p279
      $region42: #{upblock_forward.1} parent=5 // pred_check_branch
        %282 = sbr.rel (%p280) target = $region44
      $region43: #{upblock_forward.1} parent=5 // pred_region
        // Predicated region
        $region45: #{upblock_forward.1} parent=43 // pred_check
          %p283 = pneg %p38
        $region46: #{upblock_forward.1} parent=43 // pred_check_branch
          %285 = sbr.rel (%p283) target = $region48
        $region47: #{upblock_forward.1} parent=43 // pred_region
          %p286 = scmp.lt.s32.totalorder %s18, 1
          %s287 = scalar_select %p286, %s18, 1
          %s288 = smul.addr %s287, 2
          %s289 = scalar_lea.vmem %s0, %s288
        $region48: #{upblock_forward.1} parent=43 // pred_fallthru
          _
        // Predicated region
        $region49: #{upblock_forward.1} parent=43 // pred_check
          %p290 = pneg %p64
        $region50: #{upblock_forward.1} parent=43 // pred_check_branch
          %292 = sbr.rel (%p290) target = $region52
        $region51: #{upblock_forward.1} parent=43 // pred_region
          %p293 = scmp.lt.s32.totalorder %s18, 1
          %s294 = scalar_select %p293, %s18, 1
          %s295 = smul.addr %s294, 2
          %s296 = scalar_lea.vmem %s1, %s295
        $region52: #{upblock_forward.1} parent=43 // pred_fallthru
          _
      $region44: #{upblock_forward.1} parent=5 // pred_fallthru
        _
      %p297 = scmp.le.s32.totalorder 1, %s18
      %p298 = scmp.lt.s32.totalorder %s18, 3
      %p299 = pnand %p297, %p298
      %p300 = pneg %p299
      // Predicated region
      $region53: #{upblock_forward.1} parent=5 // pred_check
        _
      $region54: #{upblock_forward.1} parent=5 // pred_check_branch
        %302 = sbr.rel (%p299) target = $region56
      $region55: #{upblock_forward.1} parent=5 // pred_region
        %s303 = ssub.s32 %s18, 1
        %p304 = scmp.lt.s32.totalorder %s23, 1
        %s305 = scalar_select %p304, %s23, 1
        %s306 = smul.addr %s305, 2
        %s307 = scalar_lea.vmem %s0, %s306
        %p308 = pneg %p44
        %p309 = pneg %p41
        %p310 = scmp.lt.s32.totalorder %s23, 1
        %s311 = scalar_select %p310, %s23, 1
        %s312 = smul.addr %s311, 2
        %s313 = scalar_lea.vmem %s1, %s312
        %p314 = pneg %p70
        %p315 = pneg %p67
        %p316 = pneg %p91
        %p317 = pneg %p88
        %p318 = pneg %p112
        %p319 = pneg %p109
        %p320 = pneg %p133
        %p321 = pneg %p130
        %p322 = pneg %p154
        %p323 = pneg %p151
        %p324 = pneg %p175
        %p325 = pneg %p172
        %p326 = pneg %p196
        %p327 = pneg %p193
        %p328 = pneg %p217
        %p329 = pneg %p214
        %p330 = pneg %p243
        %p331 = pneg %p240
        %s332 = sand.u32 %s230, 1
        %s333 = scalar_lea.sflag [#allocation3], %s332
        %s334 = sand.u32 %s230, 1
        %s335 = smul.addr %s334, 8
        %s336 = scalar_lea.vmem [#allocation2], %s335
        %p337 = scmp.lt.s32.totalorder %s23, 1
        %s338 = scalar_select %p337, %s23, 1
        %s339 = smul.addr %s338, 2
        %s340 = scalar_lea.vmem %s0, %s339
        %p341 = scmp.lt.s32.totalorder %s23, 1
        %s342 = scalar_select %p341, %s23, 1
        %s343 = smul.addr %s342, 2
        %s344 = scalar_lea.vmem %s1, %s343
        %v346 = vld [vmem:[%s340] sm:$0x3]
        %v347 = vld [vmem:[%s344] sm:$0x3]
        %v348 = vlaneseq
        %v349 = vand.u32 %v348, 127
        %v350 = vlaneseq
        %v351 = vshrl.u32 %v350, 7
        %v352 = vadd.s32 %v351, 8
        %v353 = vmul.u32 %v351, 4
        %v354 = vmul.u32 %v352, 4
        %v355 = vadd.s32 %v353, 4
        %v356 = vadd.s32 %v354, 4
        %vm357 = vcmp.eq.s32.totalorder %v349, %v355
        %vm358 = vcmp.eq.s32.totalorder %v349, %v356
        %v359 = vsel %vm357, 1.0, 0.0
        %v360 = vsel %vm358, 1.0, 0.0
        %v361 = vpack.c.bf16 %v360, %v359
        %vm362 = vcmask 130048
        %v364 = vsel %vm362, %v346, 0
        %366 = vmatprep.subr.bf16.mxu0 0
        %367 = vmatpush1.bf16.msra.mxu0 %v361
        %368 = vmatprep.subr.bf16.mxu0 0
        %369 = vmatpush1.bf16.msra.mxu0 0
        %370 = vmatprep.subr.bf16.mxu0 0
        %371 = vmatpush1.bf16.msra.mxu0 0
        %372 = vmatprep.subr.bf16.mxu0 0
        %373 = vmatpush1.bf16.msra.mxu0 0
        %374 = vmatprep.subr.bf16.mxu0 0
        %375 = vmatpush1.bf16.msra.mxu0 0
        %376 = vmatprep.subr.bf16.mxu0 0
        %377 = vmatpush1.bf16.msra.mxu0 0
        %378 = vmatprep.subr.bf16.mxu0 0
        %379 = vmatpush1.bf16.msra.mxu0 0
        %380 = vmatprep.subr.bf16.mxu0 0
        %381 = vmatpush1.bf16.msra.mxu0 0
        %382 = vmatprep.subr.bf16.mxu0 0
        %383 = vmatpush1.bf16.msra.mxu0 0
        %384 = vmatprep.subr.bf16.mxu0 0
        %385 = vmatpush1.bf16.msra.mxu0 0
        %386 = vmatprep.subr.bf16.mxu0 0
        %387 = vmatpush1.bf16.msra.mxu0 0
        %388 = vmatprep.subr.bf16.mxu0 0
        %389 = vmatpush1.bf16.msra.mxu0 0
        %390 = vmatprep.subr.bf16.mxu0 0
        %391 = vmatpush1.bf16.msra.mxu0 0
        %392 = vmatprep.subr.bf16.mxu0 0
        %393 = vmatpush1.bf16.msra.mxu0 0
        %394 = vmatprep.subr.bf16.mxu0 0
        %395 = vmatpush1.bf16.msra.mxu0 0
        %396 = vmatprep.subr.bf16.mxu0 0
        %397 = vmatpush1.bf16.msra.mxu0 0
        %398 = vmatprep.mubr.bf16.mxu0 0
        %399 = vmatmul.mubr.bf16.gmra.mrb[0].mxu0 %v364
        %v400 = vpop.f32.mrb[0].mxu0
        %v401 = vadd.f32 0.0, %v400
        %v402 = vpop.f32.mrb[0].mxu0
        %v403 = vpop.f32.mrb[0].mxu0
        %v404 = vpop.f32.mrb[0].mxu0
        %405 = vdwg.mxu0
        %v406 = vpack.c.bf16 %v401, %v401
        %v408 = vrot.slane %v406, 6
        %409 = vrot.lane.b32.xlu0 %v408, 127
        %v410 = vpop.permute.xlu0 %409
        %v411 = vrot.slane %v406, 4
        %412 = vrot.lane.b32.xlu0 %v411, 126
        %v413 = vpop.permute.xlu0 %412
        %v414 = vrot.slane %v406, 2
        %415 = vrot.lane.b32.xlu0 %v414, 125
        %v416 = vpop.permute.xlu0 %415
        %417 = vrot.lane.b32.xlu0 %v406, 124
        %v418 = vpop.permute.xlu0 %417
        %vm419 = vcmask 1041408
        %v422 = vsel %vm419, %v406, %v410
        %vm423 = vcmask 1043456
        %v425 = vsel %vm423, %v422, %v413
        %vm426 = vcmask 1045504
        %v428 = vsel %vm426, %v425, %v416
        %v430 = vld [vmem:[%s2] sm:$0x3]
        %v431 = vld [vmem:[%s3] sm:$0xf]
        %433 = vset.pattern.permute.xlu0 0
        %434 = vperm.xlu0 %433, %v431
        %v435 = vpop.permute.xlu0 %434
        %vm437 = vcmask 162816
        %v439 = vsel %vm437, %v430, 0
        %v442 = vsel %vm419, %v418, 0
        %444 = vmatprep.subr.bf16.mxu0 0
        %445 = vmatpush1.bf16.msra.mxu0 %v428
        %446 = vmatprep.subr.bf16.mxu0 0
        %447 = vmatpush1.bf16.msra.mxu0 %v442
        %448 = vmatprep.subr.bf16.mxu0 0
        %449 = vmatpush1.bf16.msra.mxu0 0
        %450 = vmatprep.subr.bf16.mxu0 0
        %451 = vmatpush1.bf16.msra.mxu0 0
        %452 = vmatprep.subr.bf16.mxu0 0
        %453 = vmatpush1.bf16.msra.mxu0 0
        %454 = vmatprep.subr.bf16.mxu0 0
        %455 = vmatpush1.bf16.msra.mxu0 0
        %456 = vmatprep.subr.bf16.mxu0 0
        %457 = vmatpush1.bf16.msra.mxu0 0
        %458 = vmatprep.subr.bf16.mxu0 0
        %459 = vmatpush1.bf16.msra.mxu0 0
        %460 = vmatprep.subr.bf16.mxu0 0
        %461 = vmatpush1.bf16.msra.mxu0 0
        %462 = vmatprep.subr.bf16.mxu0 0
        %463 = vmatpush1.bf16.msra.mxu0 0
        %464 = vmatprep.subr.bf16.mxu0 0
        %465 = vmatpush1.bf16.msra.mxu0 0
        %466 = vmatprep.subr.bf16.mxu0 0
        %467 = vmatpush1.bf16.msra.mxu0 0
        %468 = vmatprep.subr.bf16.mxu0 0
        %469 = vmatpush1.bf16.msra.mxu0 0
        %470 = vmatprep.subr.bf16.mxu0 0
        %471 = vmatpush1.bf16.msra.mxu0 0
        %472 = vmatprep.subr.bf16.mxu0 0
        %473 = vmatpush1.bf16.msra.mxu0 0
        %474 = vmatprep.subr.bf16.mxu0 0
        %475 = vmatpush1.bf16.msra.mxu0 0
        %476 = vmatprep.mubr.bf16.mxu0 0
        %477 = vmatmul.mubr.bf16.gmra.mrb[0].mxu0 %v439
        %v478 = vpop.f32.mrb[0].mxu0
        %v479 = vadd.f32 %v435, %v478
        %v480 = vpop.f32.mrb[0].mxu0
        %v481 = vpop.f32.mrb[0].mxu0
        %v482 = vpop.f32.mrb[0].mxu0
        %483 = vdwg.mxu0
        %v484 = vpack.c.bf16 %v479, %v479
        %v486 = vrot.slane %v484, 6
        %487 = vrot.lane.b32.xlu0 %v486, 127
        %v488 = vpop.permute.xlu0 %487
        %v489 = vrot.slane %v484, 4
        %490 = vrot.lane.b32.xlu0 %v489, 126
        %v491 = vpop.permute.xlu0 %490
        %v492 = vrot.slane %v484, 2
        %493 = vrot.lane.b32.xlu0 %v492, 125
        %v494 = vpop.permute.xlu0 %493
        %495 = vrot.lane.b32.xlu0 %v484, 124
        %v496 = vpop.permute.xlu0 %495
        %v499 = vsel %vm419, %v484, %v488
        %v501 = vsel %vm423, %v499, %v491
        %v503 = vsel %vm426, %v501, %v494
        %v505 = vld [vmem:[%s4] sm:$0xf]
        %v506 = vld [vmem:[%s5] sm:$0xff]
        %508 = vset.pattern.permute.xlu0 0
        %509 = vperm.xlu0 %508, %v506
        %v510 = vpop.permute.xlu0 %509
        %v513 = vsel %vm437, %v505, 0
        %v516 = vsel %vm419, %v496, 0
        %518 = vmatprep.subr.bf16.mxu0 0
        %519 = vmatpush1.bf16.msra.mxu0 %v503
        %520 = vmatprep.subr.bf16.mxu0 0
        %521 = vmatpush1.bf16.msra.mxu0 %v516
        %522 = vmatprep.subr.bf16.mxu0 0
        %523 = vmatpush1.bf16.msra.mxu0 0
        %524 = vmatprep.subr.bf16.mxu0 0
        %525 = vmatpush1.bf16.msra.mxu0 0
        %526 = vmatprep.subr.bf16.mxu0 0
        %527 = vmatpush1.bf16.msra.mxu0 0
        %528 = vmatprep.subr.bf16.mxu0 0
        %529 = vmatpush1.bf16.msra.mxu0 0
        %530 = vmatprep.subr.bf16.mxu0 0
        %531 = vmatpush1.bf16.msra.mxu0 0
        %532 = vmatprep.subr.bf16.mxu0 0
        %533 = vmatpush1.bf16.msra.mxu0 0
        %534 = vmatprep.subr.bf16.mxu0 0
        %535 = vmatpush1.bf16.msra.mxu0 0
        %536 = vmatprep.subr.bf16.mxu0 0
        %537 = vmatpush1.bf16.msra.mxu0 0
        %538 = vmatprep.subr.bf16.mxu0 0
        %539 = vmatpush1.bf16.msra.mxu0 0
        %540 = vmatprep.subr.bf16.mxu0 0
        %541 = vmatpush1.bf16.msra.mxu0 0
        %542 = vmatprep.subr.bf16.mxu0 0
        %543 = vmatpush1.bf16.msra.mxu0 0
        %544 = vmatprep.subr.bf16.mxu0 0
        %545 = vmatpush1.bf16.msra.mxu0 0
        %546 = vmatprep.subr.bf16.mxu0 0
        %547 = vmatpush1.bf16.msra.mxu0 0
        %548 = vmatprep.subr.bf16.mxu0 0
        %549 = vmatpush1.bf16.msra.mxu0 0
        %550 = vmatprep.mubr.bf16.mxu0 0
        %551 = vmatmul.mubr.bf16.gmra.mrb[0].mxu0 %v513
        %v552 = vpop.f32.mrb[0].mxu0
        %v553 = vadd.f32 %v510, %v552
        %v554 = vpop.f32.mrb[0].mxu0
        %v555 = vpop.f32.mrb[0].mxu0
        %v556 = vpop.f32.mrb[0].mxu0
        %557 = vdwg.mxu0
        %v558 = vpack.c.bf16 %v553, %v553
        %v560 = vcombine.low %v347, %v347
        %v562 = vunpack.c.l.s4 1983009808
        %v563 = vunpack.c.0.s8 %v562
        %v564 = vlaneseq
        %v565 = vshrl.u32 %v564, 7
        %v566 = vsub.s32 %v563, %v565
        %v567 = vrot.slane %v560, %v566
        %v569 = vunpack.c.l.s4 1983009808
        %v570 = vunpack.c.0.s8 %v569
        %v571 = vlaneseq
        %v572 = vshrl.u32 %v571, 7
        %v573 = vsub.s32 %v570, %v572
        %v574 = vrot.slane %v347, %v573
        %575 = vrot.lane.b32.xlu0 %v567, 127
        %v576 = vpop.permute.xlu0 %575
        %v577 = vcombine.low %v574, %v574
        %578 = vrot.lane.b32.xlu0 %v577, 126
        %v579 = vpop.permute.xlu0 %578
        %v580 = vcombine.low %v567, %v567
        %581 = vrot.lane.b32.xlu0 %v580, 125
        %v582 = vpop.permute.xlu0 %581
        %583 = vrot.lane.b32.xlu0 %v574, 124
        %v584 = vpop.permute.xlu0 %583
        %v587 = vsel %vm419, %v347, %v576
        %v589 = vsel %vm423, %v587, %v579
        %v591 = vsel %vm426, %v589, %v582
        %v593 = vrot.slane %v558, 4
        %594 = vrot.lane.b32.xlu0 %v593, 127
        %v595 = vpop.permute.xlu0 %594
        %596 = vrot.lane.b32.xlu0 %v558, 126
        %v597 = vpop.permute.xlu0 %596
        %598 = vrot.lane.b32.xlu0 %v593, 125
        %v599 = vpop.permute.xlu0 %598
        %600 = vrot.lane.b32.xlu0 %v558, 124
        %v601 = vpop.permute.xlu0 %600
        %v604 = vsel %vm423, %v558, %v595
        %v608 = vsel %vm423, %v597, %v599
        %v610 = vld [vmem:[%s6] sm:$0xf]
        %v611 = vld [vmem:[%s7] sm:$0xf]
        %vm612 = vcmask 326656
        %v614 = vsel %vm612, %v611, 0
        %v617 = vsel %vm423, %v601, 0
        %619 = vmatprep.subr.bf16.mxu0 0
        %620 = vmatpush1.bf16.msra.mxu0 %v604
        %621 = vmatprep.subr.bf16.mxu0 0
        %622 = vmatpush1.bf16.msra.mxu0 %v608
        %623 = vmatprep.subr.bf16.mxu0 0
        %624 = vmatpush1.bf16.msra.mxu0 %v617
        %625 = vmatprep.subr.bf16.mxu0 0
        %626 = vmatpush1.bf16.msra.mxu0 0
        %627 = vmatprep.subr.bf16.mxu0 0
        %628 = vmatpush1.bf16.msra.mxu0 0
        %629 = vmatprep.subr.bf16.mxu0 0
        %630 = vmatpush1.bf16.msra.mxu0 0
        %631 = vmatprep.subr.bf16.mxu0 0
        %632 = vmatpush1.bf16.msra.mxu0 0
        %633 = vmatprep.subr.bf16.mxu0 0
        %634 = vmatpush1.bf16.msra.mxu0 0
        %635 = vmatprep.subr.bf16.mxu0 0
        %636 = vmatpush1.bf16.msra.mxu0 0
        %637 = vmatprep.subr.bf16.mxu0 0
        %638 = vmatpush1.bf16.msra.mxu0 0
        %639 = vmatprep.subr.bf16.mxu0 0
        %640 = vmatpush1.bf16.msra.mxu0 0
        %641 = vmatprep.subr.bf16.mxu0 0
        %642 = vmatpush1.bf16.msra.mxu0 0
        %643 = vmatprep.subr.bf16.mxu0 0
        %644 = vmatpush1.bf16.msra.mxu0 0
        %645 = vmatprep.subr.bf16.mxu0 0
        %646 = vmatpush1.bf16.msra.mxu0 0
        %647 = vmatprep.subr.bf16.mxu0 0
        %648 = vmatpush1.bf16.msra.mxu0 0
        %649 = vmatprep.subr.bf16.mxu0 0
        %650 = vmatpush1.bf16.msra.mxu0 0
        %651 = vmatprep.mubr.bf16.mxu0 0
        %652 = vmatmul.mubr.bf16.gmra.mrb[0].mxu0 %v614
        %v653 = vpop.f32.mrb[0].mxu0
        %v654 = vadd.f32 0.0, %v653
        %v655 = vpop.f32.mrb[0].mxu0
        %v656 = vpop.f32.mrb[0].mxu0
        %v657 = vpop.f32.mrb[0].mxu0
        %658 = vdwg.mxu0
        %660 = vrot.lane.b32.xlu0 %v591, 127
        %v661 = vpop.permute.xlu0 %660
        %662 = vrot.lane.b32.xlu0 %v584, 127
        %v663 = vpop.permute.xlu0 %662
        %v666 = vsel %vm437, %v610, 0
        %v669 = vsel %vm419, %v663, 0
        %671 = vmatprep.subr.bf16.mxu0 0
        %672 = vmatpush1.bf16.msra.mxu0 %v661
        %673 = vmatprep.subr.bf16.mxu0 0
        %674 = vmatpush1.bf16.msra.mxu0 %v669
        %675 = vmatprep.subr.bf16.mxu0 0
        %676 = vmatpush1.bf16.msra.mxu0 0
        %677 = vmatprep.subr.bf16.mxu0 0
        %678 = vmatpush1.bf16.msra.mxu0 0
        %679 = vmatprep.subr.bf16.mxu0 0
        %680 = vmatpush1.bf16.msra.mxu0 0
        %681 = vmatprep.subr.bf16.mxu0 0
        %682 = vmatpush1.bf16.msra.mxu0 0
        %683 = vmatprep.subr.bf16.mxu0 0
        %684 = vmatpush1.bf16.msra.mxu0 0
        %685 = vmatprep.subr.bf16.mxu0 0
        %686 = vmatpush1.bf16.msra.mxu0 0
        %687 = vmatprep.subr.bf16.mxu0 0
        %688 = vmatpush1.bf16.msra.mxu0 0
        %689 = vmatprep.subr.bf16.mxu0 0
        %690 = vmatpush1.bf16.msra.mxu0 0
        %691 = vmatprep.subr.bf16.mxu0 0
        %692 = vmatpush1.bf16.msra.mxu0 0
        %693 = vmatprep.subr.bf16.mxu0 0
        %694 = vmatpush1.bf16.msra.mxu0 0
        %695 = vmatprep.subr.bf16.mxu0 0
        %696 = vmatpush1.bf16.msra.mxu0 0
        %697 = vmatprep.subr.bf16.mxu0 0
        %698 = vmatpush1.bf16.msra.mxu0 0
        %699 = vmatprep.subr.bf16.mxu0 0
        %700 = vmatpush1.bf16.msra.mxu0 0
        %701 = vmatprep.subr.bf16.mxu0 0
        %702 = vmatpush1.bf16.msra.mxu0 0
        %703 = vmatprep.mubr.bf16.mxu0 0
        %704 = vmatmul.mubr.bf16.gmra.mrb[0].mxu0 %v666
        %v705 = vpop.f32.mrb[0].mxu0
        %v706 = vadd.f32 %v654, %v705
        %v707 = vpop.f32.mrb[0].mxu0
        %v708 = vpop.f32.mrb[0].mxu0
        %v709 = vpop.f32.mrb[0].mxu0
        %710 = vdwg.mxu0
        %v711 = vld [vmem:[%s8] sm:$0xff]
        %713 = vset.pattern.permute.xlu0 0
        %714 = vperm.xlu0 %713, %v711
        %v715 = vpop.permute.xlu0 %714
        %v717 = vadd.f32 %v706, %v715
        %vm718 = vcmask 465920
        %719 = vst.msk [vmem:[%s336] sm:$0xff] %vm718, %v717
        %s720 = sand.u32 %s230, 1
        %s721 = scalar_lea.sflag [#allocation3], %s720
        %s722 = sand.u32 %s230, 1
        %s723 = smul.addr %s722, 8
        %s724 = scalar_lea.vmem [#allocation2], %s723
        // Predicated region
        $region57: #{upblock_forward.1} parent=55 // pred_check
          %p725 = pneg %p240
        $region58: #{upblock_forward.1} parent=55 // pred_check_branch
          %727 = sbr.rel (%p725) target = $region60
        $region59: #{upblock_forward.1} parent=55 // pred_region
          %s729 = ssub.s32 128, 128
          %730 = vsyncadd %s721, %s729
          %s731 = smul.addr %s23, 128
          %s732 = scalar_lea.hbm %s9, %s731
          %s734 = sshll.u32 %s724, 4
          %s735 = int_to_ptr.vmem [resolvable:$true] %s734
          %737 = dma.vmem_to_hbm [thread:$0]  %s735, 128, %s732, %s721
        $region60: #{upblock_forward.1} parent=55 // pred_fallthru
          _
      $region56: #{upblock_forward.1} parent=5 // pred_fallthru
        _
      %p738 = scmp.le.s32.totalorder 2, %s18
      // Predicated region
      $region61: #{upblock_forward.1} parent=5 // pred_check
        %p739 = pneg %p738
      $region62: #{upblock_forward.1} parent=5 // pred_check_branch
        %741 = sbr.rel (%p739) target = $region64
      $region63: #{upblock_forward.1} parent=5 // pred_region
        %s742 = ssub.s32 %s18, 2
        // Predicated region
        $region65: #{upblock_forward.1} parent=63 // pred_check
          %p743 = pneg %p246
        $region66: #{upblock_forward.1} parent=63 // pred_check_branch
          %745 = sbr.rel (%p743) target = $region68
        $region67: #{upblock_forward.1} parent=63 // pred_region
          %s746 = sand.u32 %s231, 1
          %s747 = scalar_lea.sflag [#allocation3], %s746
          %s748 = sand.u32 %s231, 1
          %s749 = smul.addr %s748, 8
          %s750 = scalar_lea.vmem [#allocation2], %s749
          %751 = dma.done %s747, 128
        $region68: #{upblock_forward.1} parent=63 // pred_fallthru
          _
      $region64: #{upblock_forward.1} parent=5 // pred_fallthru
        _
    $region6: #{upblock_forward.1} parent=1 // loop_footer
      %s22 = sadd.s32 1, %s18
    $region7: #{upblock_forward.1} parent=1 // loop_footer_branch
      %17 = sbr.rel target = $region3
    $region8: #{upblock_forward.1} parent=1 // loop_exit
      _
    %752 = vsyncpa [#allocation3], 1
    %s753 = scalar_lea.sflag [#allocation3], 1
    %754 = vsyncpa %s753, 1

</llo_original>
